<compile_context>
chip_gen: v6e
topology: v6e:2x2x1
jax: 0.10.0
libtpu: 0.0.40
codegen_flags: <defaults>
</compile_context>

<pallas_src>
import functools

import jax
import jax.numpy as jnp
from jax.experimental import pallas as pl
from jax.experimental.pallas import tpu as pltpu


# ---------------------------------------------------------------------------
# Tiling heuristics
# ---------------------------------------------------------------------------

_LANE = 128                         # last-dim alignment
_SUBLANE = 8                        # second-to-last-dim alignment (f32)
_TM_MAX = 256                       # max rows per output tile
_TN_MAX = 512                       # max cols per output tile
_VMEM_BUDGET = 20 * 1024 * 1024     # double-buffered working-set budget
_VMEM_LIMIT = 32 * 1024 * 1024      # scoped VMEM limit handed to Mosaic


def _round_up(x, m):
    return (x + m - 1) // m * m


def _largest_divisor_tile(total, pref, align):
    """Largest multiple of `align` dividing `total`, capped at `pref`."""
    best = align
    t = align
    cap = min(max(pref, align), total)
    while t <= cap:
        if total % t == 0:
            best = t
        t += align
    return best


def _working_set_bytes(tm, tn, tk, in_itemsize):
    # double-buffered x, w, bias tiles + double-buffered f32 output tile
    return (2 * tm * tk * in_itemsize
            + 2 * tk * tn * in_itemsize
            + 2 * _SUBLANE * tn * 4
            + 2 * tm * tn * 4)


def _pick_tk(k_pad, tn, in_itemsize):
    """Biggest multiple of 128 dividing k_pad whose working set fits the VMEM
    budget.  Prefers collapsing the K grid axis entirely (tk == k_pad)."""
    for tk in range(k_pad, _LANE - 1, -_LANE):
        if k_pad % tk == 0 and _working_set_bytes(_TM_MAX, tn, tk,
                                                  in_itemsize) <= _VMEM_BUDGET:
            return tk
    return _LANE


# ---------------------------------------------------------------------------
# Kernels
# ---------------------------------------------------------------------------

def _temp_linear_kernel_1k(temp_ref, x_ref, w_ref, b_ref, o_ref):
    # Single K step: whole reduction in one MXU pass, fused bias + 1/T epilogue.
    # temp_ref: SMEM (1,) f32 ; x_ref: [tm, K] bf16 ; w_ref: [K, tn] bf16
    # b_ref: [1, tn] f32 ; o_ref: [tm, tn] f32
    inv_t = 1.0 / temp_ref[0]
    acc = jnp.dot(x_ref[...], w_ref[...], preferred_element_type=jnp.float32)
    o_ref[...] = ((acc + b_ref[...]) * inv_t).astype(o_ref.dtype)


def _temp_linear_kernel_nk(temp_ref, x_ref, w_ref, b_ref, o_ref):
    # Multi K step: accumulate straight into the f32 output tile (its block
    # index is invariant over k) -- no extra VMEM scratch needed.
    k = pl.program_id(2)

    @pl.when(k == 0)
    def _init():
        o_ref[...] = jnp.zeros_like(o_ref)

    o_ref[...] += jnp.dot(x_ref[...], w_ref[...],
                          preferred_element_type=jnp.float32)

    @pl.when(k == pl.num_programs(2) - 1)
    def _finalize():
        inv_t = 1.0 / temp_ref[0]
        o_ref[...] = (o_ref[...] + b_ref[...]) * inv_t


# ---------------------------------------------------------------------------
# One-time parameter preparation (hoisted out of the per-call forward path)
# ---------------------------------------------------------------------------

def prepare_classifier_params(w, b, *, compute_dtype=jnp.bfloat16):
    """Cast the wrapped classifier's weights to the MXU compute dtype and pad
    to lane multiples ONCE at module init (not per forward call)."""
    K, N = w.shape
    k_pad = _round_up(K, _LANE)
    n_pad = _round_up(N, _LANE)
    w_p = jnp.pad(w.astype(compute_dtype), ((0, k_pad - K), (0, n_pad - N)))
    b_p = jnp.pad(b.astype(jnp.float32), (0, n_pad - N)).reshape(1, n_pad)
    return {"w": w_p, "b": b_p}


# ---------------------------------------------------------------------------
# Forward
# ---------------------------------------------------------------------------

@functools.partial(jax.jit, static_argnames=("num_classes", "compute_dtype"))
def model_with_temperature_forward(params, x_nchw, temperature, *,
                                   num_classes, compute_dtype=jnp.bfloat16):
    """logits = flatten(x) @ W + b ; return logits / temperature."""
    w_p, b_p = params["w"], params["b"]
    k_pad, n_pad = w_p.shape
    in_itemsize = jnp.dtype(compute_dtype).itemsize

    B = x_nchw.shape[0]
    x_flat = x_nchw.reshape(B, -1)          # matches torch .view(B, -1)
    K = x_flat.shape[1]
    assert K <= k_pad, "input feature size exceeds prepared weight size"

    b_pad = _round_up(B, _SUBLANE)
    tm = _largest_divisor_tile(b_pad, _TM_MAX, _SUBLANE)
    tn = _largest_divisor_tile(n_pad, _TN_MAX, _LANE)
    tk = _pick_tk(k_pad, tn, in_itemsize)

    m_steps = b_pad // tm
    n_steps = n_pad // tn
    k_steps = k_pad // tk

    # Give the second TensorCore (v7x megacore) work when the natural grid has
    # only a single output tile.
    if m_steps == 1 and n_steps == 1:
        if n_pad % (2 * _LANE) == 0:
            tn, n_steps = n_pad // 2, 2
        elif b_pad % (2 * _SUBLANE) == 0:
            tm, m_steps = b_pad // 2, 2

    # Minimal activation prep: cast + pad only where needed (K=C*H*W is often
    # already a multiple of 128); fuses under jit -- no zeros+scatter pass.
    x_c = x_flat.astype(compute_dtype)
    if (b_pad, k_pad) != (B, K):
        x_c = jnp.pad(x_c, ((0, b_pad - B), (0, k_pad - K)))
    t = temperature.reshape(1).astype(jnp.float32)

    cost = pl.CostEstimate(
        flops=2 * b_pad * k_pad * n_pad,
        transcendentals=0,
        bytes_accessed=(x_c.size * in_itemsize + w_p.size * in_itemsize
                        + b_p.size * 4 + b_pad * n_pad * 4),
    )

    if k_steps == 1:
        kernel = _temp_linear_kernel_1k
        grid = (m_steps, n_steps)
        in_specs = [
            pl.BlockSpec(memory_space=pltpu.SMEM),               # temperature
            pl.BlockSpec((tm, tk), lambda i, j: (i, 0)),          # x tile
            pl.BlockSpec((tk, tn), lambda i, j: (0, j)),          # w tile
            pl.BlockSpec((1, tn), lambda i, j: (0, j)),           # bias tile
        ]
        out_spec = pl.BlockSpec((tm, tn), lambda i, j: (i, j))
        dims = ("parallel", "parallel")
    else:
        kernel = _temp_linear_kernel_nk
        grid = (m_steps, n_steps, k_steps)
        in_specs = [
            pl.BlockSpec(memory_space=pltpu.SMEM),                # temperature
            pl.BlockSpec((tm, tk), lambda i, j, k: (i, k)),       # x tile
            pl.BlockSpec((tk, tn), lambda i, j, k: (k, j)),       # w tile
            pl.BlockSpec((1, tn), lambda i, j, k: (0, j)),        # bias tile
        ]
        out_spec = pl.BlockSpec((tm, tn), lambda i, j, k: (i, j))
        dims = ("parallel", "parallel", "arbitrary")

    out_pad = pl.pallas_call(
        kernel,
        out_shape=jax.ShapeDtypeStruct((b_pad, n_pad), jnp.float32),
        grid_spec=pltpu.PrefetchScalarGridSpec(
            num_scalar_prefetch=0,
            grid=grid,
            in_specs=in_specs,
            out_specs=out_spec,
        ),
        compiler_params=pltpu.CompilerParams(
            dimension_semantics=dims,
            vmem_limit_bytes=_VMEM_LIMIT,
        ),
        cost_estimate=cost,
    )(t, x_c, w_p, b_p)

    return out_pad[:B, :num_classes]


# ---------------------------------------------------------------------------
# Demo / correctness check
# ---------------------------------------------------------------------------

if __name__ == "__main__":
    # Small shapes consistent with the module's forward: NCHW image input,
    # classification logits output.
    B, C, H, W = 2, 4, 16, 16
    N_CLASSES = 32
    K = C * H * W

    key = jax.random.PRNGKey(0)
    kx, kw = jax.random.split(key)

    x = jax.random.normal(kx, (B, C, H, W), dtype=jnp.float32)

    # Deterministic synthetic parameters for the wrapped classifier.
    w = jax.random.normal(kw, (K, N_CLASSES), dtype=jnp.float32) * 0.02
    bias = jnp.zeros((N_CLASSES,), dtype=jnp.float32)
    # nn.Parameter(torch.ones(1) * 1.0) starts at 1.0; use a non-trivial value
    # so the temperature division is observable.
    temperature = jnp.array([1.5], dtype=jnp.float32)

    # One-time parameter preparation (module init) -- not repeated per call.
    params = prepare_classifier_params(w, bias)

    out = model_with_temperature_forward(params, x, temperature,
                                         num_classes=N_CLASSES)
    out = jax.block_until_ready(out)

    # Pure-JAX reference with the same bf16-input / f32-accumulate numerics.
    x_ref = x.reshape(B, K).astype(jnp.bfloat16).astype(jnp.float32)
    w_ref = w.astype(jnp.bfloat16).astype(jnp.float32)
    ref = (x_ref @ w_ref + bias[None, :]) / temperature[0]

    assert out.shape == (B, N_CLASSES)
    assert jnp.allclose(out, ref, atol=1e-3, rtol=1e-3), "mismatch vs reference"

    # TODO(synk): set_temperature / set_mid_cal / set_spread_cal / temp_softening
    # are host-side LBFGS/Adam calibration loops (not part of forward); not
    # implemented as kernels.
    print("KERNEL_OK")
</pallas_src>

<mosaic_0001>
module attributes {stable_mosaic.version = 11 : i64} {
  func.func @_temp_linear_kernel_1k(%arg0: i32, %arg1: i32, %arg2: memref<1xf32, #tpu.memory_space<smem>>, %arg3: memref<8x1024xbf16, #tpu.memory_space<vmem>>, %arg4: memref<1024x128xbf16, #tpu.memory_space<vmem>>, %arg5: memref<1x128xf32, #tpu.memory_space<vmem>>, %arg6: memref<8x128xf32, #tpu.memory_space<vmem>>) attributes {dimension_semantics = [#tpu.dimension_semantics<parallel>, #tpu.dimension_semantics<parallel>], iteration_bounds = array<i64: 1, 1>, scalar_prefetch = 0 : i64, scratch_operands = 0 : i64, tpu.core_type = #tpu.core_type<tc>, window_params = [{transform_indices = @transform_0, window_bounds = array<i64: 1>}, {transform_indices = @transform_1, window_bounds = array<i64: 8, 1024>}, {transform_indices = @transform_2, window_bounds = array<i64: 1024, 128>}, {transform_indices = @transform_3, window_bounds = array<i64: 1, 128>}, {transform_indices = @transform_4, window_bounds = array<i64: 8, 128>}]} {
    %c0 = arith.constant 0 : index
    %0 = memref.load %arg2[%c0] : memref<1xf32, #tpu.memory_space<smem>>
    %cst = arith.constant 1.000000e+00 : f32
    %1 = arith.divf %cst, %0 : f32
    %c0_0 = arith.constant 0 : index
    %c0_1 = arith.constant 0 : index
    %2 = vector.load %arg3[%c0_0, %c0_1] : memref<8x1024xbf16, #tpu.memory_space<vmem>>, vector<8x1024xbf16>
    %c0_2 = arith.constant 0 : index
    %c0_3 = arith.constant 0 : index
    %3 = vector.load %arg4[%c0_2, %c0_3] : memref<1024x128xbf16, #tpu.memory_space<vmem>>, vector<1024x128xbf16>
    %cst_4 = arith.constant dense<0.000000e+00> : vector<8x128xf32>
    %4 = tpu.matmul %2, %3, %cst_4 {dimension_numbers = #tpu.dot_dimension_numbers<[1], [0], [0], [1], [0, 0, 1, 1], [], []>} : vector<8x1024xbf16>, vector<1024x128xbf16>, vector<8x128xf32> -> vector<8x128xf32>
    %c0_5 = arith.constant 0 : index
    %c0_6 = arith.constant 0 : index
    %5 = vector.load %arg5[%c0_5, %c0_6] : memref<1x128xf32, #tpu.memory_space<vmem>>, vector<1x128xf32>
    %6 = vector.broadcast %5 : vector<1x128xf32> to vector<8x128xf32>
    %7 = arith.addf %4, %6 : vector<8x128xf32>
    %8 = vector.broadcast %1 : f32 to vector<8x128xf32>
    %9 = arith.mulf %7, %8 : vector<8x128xf32>
    %c0_7 = arith.constant 0 : index
    %c0_8 = arith.constant 0 : index
    %10 = vector.load %arg6[%c0_7, %c0_8] : memref<8x128xf32, #tpu.memory_space<vmem>>, vector<8x128xf32>
    tpu.vector_store %arg6[%c0_7, %c0_8], %9 {strides = array<i32>} : memref<8x128xf32, #tpu.memory_space<vmem>>, vector<8x128xf32>,
    return
  }
  func.func @transform_0(%arg0: i32, %arg1: i32) -> i32 {
    %c0_i32 = arith.constant 0 : i32
    %c0_i32_0 = arith.constant 0 : i32
    return %c0_i32 : i32
  }
  func.func @transform_1(%arg0: i32, %arg1: i32) -> (i32, i32) {
    %c0_i32 = arith.constant 0 : i32
    %c0_i32_0 = arith.constant 0 : i32
    return %arg0, %c0_i32 : i32, i32
  }
  func.func @transform_2(%arg0: i32, %arg1: i32) -> (i32, i32) {
    %c0_i32 = arith.constant 0 : i32
    %c0_i32_0 = arith.constant 0 : i32
    return %c0_i32, %arg1 : i32, i32
  }
  func.func @transform_3(%arg0: i32, %arg1: i32) -> (i32, i32) {
    %c0_i32 = arith.constant 0 : i32
    %c0_i32_0 = arith.constant 0 : i32
    return %c0_i32, %arg1 : i32, i32
  }
  func.func @transform_4(%arg0: i32, %arg1: i32) -> (i32, i32) {
    %c0_i32 = arith.constant 0 : i32
    return %arg0, %arg1 : i32, i32
  }
}

</mosaic_0001>

<llo_original>
// kernel: model_with_temperature_forward.1
$region0: #{model_with_temperature_forward.1}
  #allocation0 [shape = 'u32[]', space=smem, size = 0x4, offset = 0x4, fixed_abs, tag = 'smem constant byte address 0x4 - core index']
  #allocation1 [shape = 'u32[144,128]{1,0:T(1,128)}', space=vmem, size = 0x12000, scoped, tag = 'internal scratch']
  #allocation2 [shape = 'f32[1]{0:T(128)S(6)}', space=smem, size = 0x200, scoped, tag = 'scoped memory for model_with_temperature_forward.1']
  %s0 = inlined_call_operand.<no memory space> [shape: f32[1], index: 0, kind: input, shape index: {}]
  %s1 = inlined_call_operand.vmem [shape: bf16[8,1024], index: 1, kind: input, shape index: {}]
  %s2 = inlined_call_operand.hbm [shape: bf16[1024,128], index: 2, kind: input, shape index: {}]
  %s3 = inlined_call_operand.vmem [shape: f32[1,128], index: 3, kind: input, shape index: {}]
  %s4 = inlined_call_operand.vmem [shape: f32[8,128], index: 4, kind: output, shape index: {}]
  %s5 = sld [smem:[#allocation0]]
  $region30: #{model_with_temperature_forward.1} parent=0
    _
  %s7 = ssub.s32 1, %s5
  %s8 = scalar_select 0, %s7, %s5
  %9 = sst [smem:[#allocation2]] %s0
  $region1: #{model_with_temperature_forward.1} parent=0
    #allocation3 [shape = 'u8[262144]{0}', space=vmem, size = 0x40000, scoped, tag = 'input window, operand 2, single buffered']
    #allocation4 [shape = 's32[1]{0}', space=sflag, size = 0x4, scoped, tag = 'scoped memory for model_with_temperature_forward.1']
    %10 = vsyncpa [#allocation4], 0
    // Predicated region
    $region2: #{model_with_temperature_forward.1} parent=1 // pred_check
      _
    $region3: #{model_with_temperature_forward.1} parent=1 // pred_check_branch
      %12 = sbr.rel (0) target = $region5
    $region4: #{model_with_temperature_forward.1} parent=1 // pred_region
      _
    $region5: #{model_with_temperature_forward.1} parent=1 // pred_fallthru
      _
    // Predicated region
    $region6: #{model_with_temperature_forward.1} parent=1 // pred_check
      _
    $region7: #{model_with_temperature_forward.1} parent=1 // pred_check_branch
      %14 = sbr.rel (0) target = $region9
    $region8: #{model_with_temperature_forward.1} parent=1 // pred_region
      _
    $region9: #{model_with_temperature_forward.1} parent=1 // pred_fallthru
      _
    // Predicated region
    $region10: #{model_with_temperature_forward.1} parent=1 // pred_check
      _
    $region11: #{model_with_temperature_forward.1} parent=1 // pred_check_branch
      %16 = sbr.rel (0) target = $region13
    $region12: #{model_with_temperature_forward.1} parent=1 // pred_region
      %s18 = ssub.s32 8192, 8192
      %19 = vsyncadd [#allocation4], %s18
      %s20 = sshll.u32 [#allocation3], 4
      %s21 = int_to_ptr.vmem [resolvable:$true] %s20
      %26 = dma.hbm_to_vmem [thread:$0]  %s2, 8192, %s21, [#allocation4], 64, 64, 4
    $region13: #{model_with_temperature_forward.1} parent=1 // pred_fallthru
      _
    // Predicated region
    $region14: #{model_with_temperature_forward.1} parent=1 // pred_check
      _
    $region15: #{model_with_temperature_forward.1} parent=1 // pred_check_branch
      %28 = sbr.rel (0) target = $region17
    $region16: #{model_with_temperature_forward.1} parent=1 // pred_region
      _
    $region17: #{model_with_temperature_forward.1} parent=1 // pred_fallthru
      _
    // Predicated region
    $region18: #{model_with_temperature_forward.1} parent=1 // pred_check
      _
    $region19: #{model_with_temperature_forward.1} parent=1 // pred_check_branch
      %30 = sbr.rel (0) target = $region21
    $region20: #{model_with_temperature_forward.1} parent=1 // pred_region
      %31 = dma.done [#allocation4], 8192
    $region21: #{model_with_temperature_forward.1} parent=1 // pred_fallthru
      _
    %s33 = sld [smem:[#allocation2]]
    %v34 = vstv %s33
    %v35 = vrcp.pop %v34
    %s36 = vtos %v35
    %v37 = vld [vmem:[%s1] sm:$0xff]
    %v38 = vld [vmem:[%s1 + $0x8] sm:$0xff]
    %v39 = vld [vmem:[%s1 + $0x10] sm:$0xff]
    %v40 = vld [vmem:[%s1 + $0x18] sm:$0xff]
    %v41 = vld [vmem:[#allocation3] sm:$0xf]
    %v42 = vld [vmem:[#allocation3 + $0x4] sm:$0xf]
    %v43 = vld [vmem:[#allocation3 + $0x8] sm:$0xf]
    %v44 = vld [vmem:[#allocation3 + $0xc] sm:$0xf]
    %v45 = vld [vmem:[#allocation3 + $0x10] sm:$0xf]
    %v46 = vld [vmem:[#allocation3 + $0x14] sm:$0xf]
    %v47 = vld [vmem:[#allocation3 + $0x18] sm:$0xf]
    %v48 = vld [vmem:[#allocation3 + $0x1c] sm:$0xf]
    %v49 = vld [vmem:[#allocation3 + $0x20] sm:$0xf]
    %v50 = vld [vmem:[#allocation3 + $0x24] sm:$0xf]
    %v51 = vld [vmem:[#allocation3 + $0x28] sm:$0xf]
    %v52 = vld [vmem:[#allocation3 + $0x2c] sm:$0xf]
    %v53 = vld [vmem:[#allocation3 + $0x30] sm:$0xf]
    %v54 = vld [vmem:[#allocation3 + $0x34] sm:$0xf]
    %v55 = vld [vmem:[#allocation3 + $0x38] sm:$0xf]
    %v56 = vld [vmem:[#allocation3 + $0x3c] sm:$0xf]
    %v57 = vld [vmem:[#allocation3 + $0x40] sm:$0xf]
    %v58 = vld [vmem:[#allocation3 + $0x44] sm:$0xf]
    %v59 = vld [vmem:[#allocation3 + $0x48] sm:$0xf]
    %v60 = vld [vmem:[#allocation3 + $0x4c] sm:$0xf]
    %v61 = vld [vmem:[#allocation3 + $0x50] sm:$0xf]
    %v62 = vld [vmem:[#allocation3 + $0x54] sm:$0xf]
    %v63 = vld [vmem:[#allocation3 + $0x58] sm:$0xf]
    %v64 = vld [vmem:[#allocation3 + $0x5c] sm:$0xf]
    %v65 = vld [vmem:[#allocation3 + $0x60] sm:$0xf]
    %v66 = vld [vmem:[#allocation3 + $0x64] sm:$0xf]
    %v67 = vld [vmem:[#allocation3 + $0x68] sm:$0xf]
    %v68 = vld [vmem:[#allocation3 + $0x6c] sm:$0xf]
    %v69 = vld [vmem:[#allocation3 + $0x70] sm:$0xf]
    %v70 = vld [vmem:[#allocation3 + $0x74] sm:$0xf]
    %v71 = vld [vmem:[#allocation3 + $0x78] sm:$0xf]
    %v72 = vld [vmem:[#allocation3 + $0x7c] sm:$0xf]
    %v73 = vld [vmem:[#allocation3 + $0x80] sm:$0xf]
    %v74 = vld [vmem:[#allocation3 + $0x84] sm:$0xf]
    %v75 = vld [vmem:[#allocation3 + $0x88] sm:$0xf]
    %v76 = vld [vmem:[#allocation3 + $0x8c] sm:$0xf]
    %v77 = vld [vmem:[#allocation3 + $0x90] sm:$0xf]
    %v78 = vld [vmem:[#allocation3 + $0x94] sm:$0xf]
    %v79 = vld [vmem:[#allocation3 + $0x98] sm:$0xf]
    %v80 = vld [vmem:[#allocation3 + $0x9c] sm:$0xf]
    %v81 = vld [vmem:[#allocation3 + $0xa0] sm:$0xf]
    %v82 = vld [vmem:[#allocation3 + $0xa4] sm:$0xf]
    %v83 = vld [vmem:[#allocation3 + $0xa8] sm:$0xf]
    %v84 = vld [vmem:[#allocation3 + $0xac] sm:$0xf]
    %v85 = vld [vmem:[#allocation3 + $0xb0] sm:$0xf]
    %v86 = vld [vmem:[#allocation3 + $0xb4] sm:$0xf]
    %v87 = vld [vmem:[#allocation3 + $0xb8] sm:$0xf]
    %v88 = vld [vmem:[#allocation3 + $0xbc] sm:$0xf]
    %v89 = vld [vmem:[#allocation3 + $0xc0] sm:$0xf]
    %v90 = vld [vmem:[#allocation3 + $0xc4] sm:$0xf]
    %v91 = vld [vmem:[#allocation3 + $0xc8] sm:$0xf]
    %v92 = vld [vmem:[#allocation3 + $0xcc] sm:$0xf]
    %v93 = vld [vmem:[#allocation3 + $0xd0] sm:$0xf]
    %v94 = vld [vmem:[#allocation3 + $0xd4] sm:$0xf]
    %v95 = vld [vmem:[#allocation3 + $0xd8] sm:$0xf]
    %v96 = vld [vmem:[#allocation3 + $0xdc] sm:$0xf]
    %v97 = vld [vmem:[#allocation3 + $0xe0] sm:$0xf]
    %v98 = vld [vmem:[#allocation3 + $0xe4] sm:$0xf]
    %v99 = vld [vmem:[#allocation3 + $0xe8] sm:$0xf]
    %v100 = vld [vmem:[#allocation3 + $0xec] sm:$0xf]
    %v101 = vld [vmem:[#allocation3 + $0xf0] sm:$0xf]
    %v102 = vld [vmem:[#allocation3 + $0xf4] sm:$0xf]
    %v103 = vld [vmem:[#allocation3 + $0xf8] sm:$0xf]
    %v104 = vld [vmem:[#allocation3 + $0xfc] sm:$0xf]
    %v105 = vld [vmem:[#allocation3 + $0x100] sm:$0xf]
    %v106 = vld [vmem:[#allocation3 + $0x104] sm:$0xf]
    %v107 = vld [vmem:[#allocation3 + $0x108] sm:$0xf]
    %v108 = vld [vmem:[#allocation3 + $0x10c] sm:$0xf]
    %v109 = vld [vmem:[#allocation3 + $0x110] sm:$0xf]
    %v110 = vld [vmem:[#allocation3 + $0x114] sm:$0xf]
    %v111 = vld [vmem:[#allocation3 + $0x118] sm:$0xf]
    %v112 = vld [vmem:[#allocation3 + $0x11c] sm:$0xf]
    %v113 = vld [vmem:[#allocation3 + $0x120] sm:$0xf]
    %v114 = vld [vmem:[#allocation3 + $0x124] sm:$0xf]
    %v115 = vld [vmem:[#allocation3 + $0x128] sm:$0xf]
    %v116 = vld [vmem:[#allocation3 + $0x12c] sm:$0xf]
    %v117 = vld [vmem:[#allocation3 + $0x130] sm:$0xf]
    %v118 = vld [vmem:[#allocation3 + $0x134] sm:$0xf]
    %v119 = vld [vmem:[#allocation3 + $0x138] sm:$0xf]
    %v120 = vld [vmem:[#allocation3 + $0x13c] sm:$0xf]
    %v121 = vld [vmem:[#allocation3 + $0x140] sm:$0xf]
    %v122 = vld [vmem:[#allocation3 + $0x144] sm:$0xf]
    %v123 = vld [vmem:[#allocation3 + $0x148] sm:$0xf]
    %v124 = vld [vmem:[#allocation3 + $0x14c] sm:$0xf]
    %v125 = vld [vmem:[#allocation3 + $0x150] sm:$0xf]
    %v126 = vld [vmem:[#allocation3 + $0x154] sm:$0xf]
    %v127 = vld [vmem:[#allocation3 + $0x158] sm:$0xf]
    %v128 = vld [vmem:[#allocation3 + $0x15c] sm:$0xf]
    %v129 = vld [vmem:[#allocation3 + $0x160] sm:$0xf]
    %v130 = vld [vmem:[#allocation3 + $0x164] sm:$0xf]
    %v131 = vld [vmem:[#allocation3 + $0x168] sm:$0xf]
    %v132 = vld [vmem:[#allocation3 + $0x16c] sm:$0xf]
    %v133 = vld [vmem:[#allocation3 + $0x170] sm:$0xf]
    %v134 = vld [vmem:[#allocation3 + $0x174] sm:$0xf]
    %v135 = vld [vmem:[#allocation3 + $0x178] sm:$0xf]
    %v136 = vld [vmem:[#allocation3 + $0x17c] sm:$0xf]
    %v137 = vld [vmem:[#allocation3 + $0x180] sm:$0xf]
    %v138 = vld [vmem:[#allocation3 + $0x184] sm:$0xf]
    %v139 = vld [vmem:[#allocation3 + $0x188] sm:$0xf]
    %v140 = vld [vmem:[#allocation3 + $0x18c] sm:$0xf]
    %v141 = vld [vmem:[#allocation3 + $0x190] sm:$0xf]
    %v142 = vld [vmem:[#allocation3 + $0x194] sm:$0xf]
    %v143 = vld [vmem:[#allocation3 + $0x198] sm:$0xf]
    %v144 = vld [vmem:[#allocation3 + $0x19c] sm:$0xf]
    %v145 = vld [vmem:[#allocation3 + $0x1a0] sm:$0xf]
    %v146 = vld [vmem:[#allocation3 + $0x1a4] sm:$0xf]
    %v147 = vld [vmem:[#allocation3 + $0x1a8] sm:$0xf]
    %v148 = vld [vmem:[#allocation3 + $0x1ac] sm:$0xf]
    %v149 = vld [vmem:[#allocation3 + $0x1b0] sm:$0xf]
    %v150 = vld [vmem:[#allocation3 + $0x1b4] sm:$0xf]
    %v151 = vld [vmem:[#allocation3 + $0x1b8] sm:$0xf]
    %v152 = vld [vmem:[#allocation3 + $0x1bc] sm:$0xf]
    %v153 = vld [vmem:[#allocation3 + $0x1c0] sm:$0xf]
    %v154 = vld [vmem:[#allocation3 + $0x1c4] sm:$0xf]
    %v155 = vld [vmem:[#allocation3 + $0x1c8] sm:$0xf]
    %v156 = vld [vmem:[#allocation3 + $0x1cc] sm:$0xf]
    %v157 = vld [vmem:[#allocation3 + $0x1d0] sm:$0xf]
    %v158 = vld [vmem:[#allocation3 + $0x1d4] sm:$0xf]
    %v159 = vld [vmem:[#allocation3 + $0x1d8] sm:$0xf]
    %v160 = vld [vmem:[#allocation3 + $0x1dc] sm:$0xf]
    %v161 = vld [vmem:[#allocation3 + $0x1e0] sm:$0xf]
    %v162 = vld [vmem:[#allocation3 + $0x1e4] sm:$0xf]
    %v163 = vld [vmem:[#allocation3 + $0x1e8] sm:$0xf]
    %v164 = vld [vmem:[#allocation3 + $0x1ec] sm:$0xf]
    %v165 = vld [vmem:[#allocation3 + $0x1f0] sm:$0xf]
    %v166 = vld [vmem:[#allocation3 + $0x1f4] sm:$0xf]
    %v167 = vld [vmem:[#allocation3 + $0x1f8] sm:$0xf]
    %v168 = vld [vmem:[#allocation3 + $0x1fc] sm:$0xf]
    %v169 = vld [vmem:[%s3] sm:$0x1]
    %v171 = vlaneseq
    %v172 = vshrl.u32 %v171, 7
    %v173 = vsub.s32 0, %v172
    %v174 = vrot.slane %v169, %v173
    %v180 = vunpack.c.l.b16 %v37
    %v181 = vunpack.c.h.b16 %v37
    %v182 = vunpack.c.l.b16 %v38
    %v183 = vunpack.c.h.b16 %v38
    %v184 = vunpack.c.l.b16 %v39
    %v185 = vunpack.c.h.b16 %v39
    %v186 = vunpack.c.l.b16 %v40
    %v187 = vunpack.c.h.b16 %v40
    %v188 = vpack.c.b16 %v180, %v180
    %v189 = vpack.c.b16 %v181, %v181
    %v190 = vpack.c.b16 %v182, %v182
    %v191 = vpack.c.b16 %v183, %v183
    %v192 = vpack.c.b16 %v184, %v184
    %v193 = vpack.c.b16 %v185, %v185
    %v194 = vpack.c.b16 %v186, %v186
    %v195 = vpack.c.b16 %v187, %v187
    %v332 = vunpack.c.l.b16 %v41
    %v333 = vunpack.c.l.b16 %v42
    %v334 = vunpack.c.l.b16 %v43
    %v335 = vunpack.c.l.b16 %v44
    %v336 = vunpack.c.l.b16 %v45
    %v337 = vunpack.c.l.b16 %v46
    %v338 = vunpack.c.l.b16 %v47
    %v339 = vunpack.c.l.b16 %v48
    %v340 = vunpack.c.l.b16 %v49
    %v341 = vunpack.c.l.b16 %v50
    %v342 = vunpack.c.l.b16 %v51
    %v343 = vunpack.c.l.b16 %v52
    %v344 = vunpack.c.l.b16 %v53
    %v345 = vunpack.c.l.b16 %v54
    %v346 = vunpack.c.l.b16 %v55
    %v347 = vunpack.c.l.b16 %v56
    %v348 = vunpack.c.l.b16 %v57
    %v349 = vunpack.c.l.b16 %v58
    %v350 = vunpack.c.l.b16 %v59
    %v351 = vunpack.c.l.b16 %v60
    %v352 = vunpack.c.l.b16 %v61
    %v353 = vunpack.c.l.b16 %v62
    %v354 = vunpack.c.l.b16 %v63
    %v355 = vunpack.c.l.b16 %v64
    %v356 = vunpack.c.l.b16 %v65
    %v357 = vunpack.c.l.b16 %v66
    %v358 = vunpack.c.l.b16 %v67
    %v359 = vunpack.c.l.b16 %v68
    %v360 = vunpack.c.l.b16 %v69
    %v361 = vunpack.c.l.b16 %v70
    %v362 = vunpack.c.l.b16 %v71
    %v363 = vunpack.c.l.b16 %v72
    %v364 = vunpack.c.l.b16 %v73
    %v365 = vunpack.c.l.b16 %v74
    %v366 = vunpack.c.l.b16 %v75
    %v367 = vunpack.c.l.b16 %v76
    %v368 = vunpack.c.l.b16 %v77
    %v369 = vunpack.c.l.b16 %v78
    %v370 = vunpack.c.l.b16 %v79
    %v371 = vunpack.c.l.b16 %v80
    %v372 = vunpack.c.l.b16 %v81
    %v373 = vunpack.c.l.b16 %v82
    %v374 = vunpack.c.l.b16 %v83
    %v375 = vunpack.c.l.b16 %v84
    %v376 = vunpack.c.l.b16 %v85
    %v377 = vunpack.c.l.b16 %v86
    %v378 = vunpack.c.l.b16 %v87
    %v379 = vunpack.c.l.b16 %v88
    %v380 = vunpack.c.l.b16 %v89
    %v381 = vunpack.c.l.b16 %v90
    %v382 = vunpack.c.l.b16 %v91
    %v383 = vunpack.c.l.b16 %v92
    %v384 = vunpack.c.l.b16 %v93
    %v385 = vunpack.c.l.b16 %v94
    %v386 = vunpack.c.l.b16 %v95
    %v387 = vunpack.c.l.b16 %v96
    %v388 = vunpack.c.l.b16 %v97
    %v389 = vunpack.c.l.b16 %v98
    %v390 = vunpack.c.l.b16 %v99
    %v391 = vunpack.c.l.b16 %v100
    %v392 = vunpack.c.l.b16 %v101
    %v393 = vunpack.c.l.b16 %v102
    %v394 = vunpack.c.l.b16 %v103
    %v395 = vunpack.c.l.b16 %v104
    %v396 = vunpack.c.l.b16 %v105
    %v397 = vunpack.c.l.b16 %v106
    %v398 = vunpack.c.l.b16 %v107
    %v399 = vunpack.c.l.b16 %v108
    %v400 = vunpack.c.l.b16 %v109
    %v401 = vunpack.c.l.b16 %v110
    %v402 = vunpack.c.l.b16 %v111
    %v403 = vunpack.c.l.b16 %v112
    %v404 = vunpack.c.l.b16 %v113
    %v405 = vunpack.c.l.b16 %v114
    %v406 = vunpack.c.l.b16 %v115
    %v407 = vunpack.c.l.b16 %v116
    %v408 = vunpack.c.l.b16 %v117
    %v409 = vunpack.c.l.b16 %v118
    %v410 = vunpack.c.l.b16 %v119
    %v411 = vunpack.c.l.b16 %v120
    %v412 = vunpack.c.l.b16 %v121
    %v413 = vunpack.c.l.b16 %v122
    %v414 = vunpack.c.l.b16 %v123
    %v415 = vunpack.c.l.b16 %v124
    %v416 = vunpack.c.l.b16 %v125
    %v417 = vunpack.c.l.b16 %v126
    %v418 = vunpack.c.l.b16 %v127
    %v419 = vunpack.c.l.b16 %v128
    %v420 = vunpack.c.l.b16 %v129
    %v421 = vunpack.c.l.b16 %v130
    %v422 = vunpack.c.l.b16 %v131
    %v423 = vunpack.c.l.b16 %v132
    %v424 = vunpack.c.l.b16 %v133
    %v425 = vunpack.c.l.b16 %v134
    %v426 = vunpack.c.l.b16 %v135
    %v427 = vunpack.c.l.b16 %v136
    %v428 = vunpack.c.l.b16 %v137
    %v429 = vunpack.c.l.b16 %v138
    %v430 = vunpack.c.l.b16 %v139
    %v431 = vunpack.c.l.b16 %v140
    %v432 = vunpack.c.l.b16 %v141
    %v433 = vunpack.c.l.b16 %v142
    %v434 = vunpack.c.l.b16 %v143
    %v435 = vunpack.c.l.b16 %v144
    %v436 = vunpack.c.l.b16 %v145
    %v437 = vunpack.c.l.b16 %v146
    %v438 = vunpack.c.l.b16 %v147
    %v439 = vunpack.c.l.b16 %v148
    %v440 = vunpack.c.l.b16 %v149
    %v441 = vunpack.c.l.b16 %v150
    %v442 = vunpack.c.l.b16 %v151
    %v443 = vunpack.c.l.b16 %v152
    %v444 = vunpack.c.l.b16 %v153
    %v445 = vunpack.c.l.b16 %v154
    %v446 = vunpack.c.l.b16 %v155
    %v447 = vunpack.c.l.b16 %v156
    %v448 = vunpack.c.l.b16 %v157
    %v449 = vunpack.c.l.b16 %v158
    %v450 = vunpack.c.l.b16 %v159
    %v451 = vunpack.c.l.b16 %v160
    %v452 = vunpack.c.l.b16 %v161
    %v453 = vunpack.c.l.b16 %v162
    %v454 = vunpack.c.l.b16 %v163
    %v455 = vunpack.c.l.b16 %v164
    %v456 = vunpack.c.l.b16 %v165
    %v457 = vunpack.c.l.b16 %v166
    %v458 = vunpack.c.l.b16 %v167
    %v459 = vunpack.c.l.b16 %v168
    %v460 = vpack.c.b16 %v333, %v332
    %v461 = vpack.c.b16 %v335, %v334
    %v462 = vpack.c.b16 %v337, %v336
    %v463 = vpack.c.b16 %v339, %v338
    %v464 = vpack.c.b16 %v341, %v340
    %v465 = vpack.c.b16 %v343, %v342
    %v466 = vpack.c.b16 %v345, %v344
    %v467 = vpack.c.b16 %v347, %v346
    %v468 = vpack.c.b16 %v349, %v348
    %v469 = vpack.c.b16 %v351, %v350
    %v470 = vpack.c.b16 %v353, %v352
    %v471 = vpack.c.b16 %v355, %v354
    %v472 = vpack.c.b16 %v357, %v356
    %v473 = vpack.c.b16 %v359, %v358
    %v474 = vpack.c.b16 %v361, %v360
    %v475 = vpack.c.b16 %v363, %v362
    %v476 = vpack.c.b16 %v365, %v364
    %v477 = vpack.c.b16 %v367, %v366
    %v478 = vpack.c.b16 %v369, %v368
    %v479 = vpack.c.b16 %v371, %v370
    %v480 = vpack.c.b16 %v373, %v372
    %v481 = vpack.c.b16 %v375, %v374
    %v482 = vpack.c.b16 %v377, %v376
    %v483 = vpack.c.b16 %v379, %v378
    %v484 = vpack.c.b16 %v381, %v380
    %v485 = vpack.c.b16 %v383, %v382
    %v486 = vpack.c.b16 %v385, %v384
    %v487 = vpack.c.b16 %v387, %v386
    %v488 = vpack.c.b16 %v389, %v388
    %v489 = vpack.c.b16 %v391, %v390
    %v490 = vpack.c.b16 %v393, %v392
    %v491 = vpack.c.b16 %v395, %v394
    %v492 = vpack.c.b16 %v397, %v396
    %v493 = vpack.c.b16 %v399, %v398
    %v494 = vpack.c.b16 %v401, %v400
    %v495 = vpack.c.b16 %v403, %v402
    %v496 = vpack.c.b16 %v405, %v404
    %v497 = vpack.c.b16 %v407, %v406
    %v498 = vpack.c.b16 %v409, %v408
    %v499 = vpack.c.b16 %v411, %v410
    %v500 = vpack.c.b16 %v413, %v412
    %v501 = vpack.c.b16 %v415, %v414
    %v502 = vpack.c.b16 %v417, %v416
    %v503 = vpack.c.b16 %v419, %v418
    %v504 = vpack.c.b16 %v421, %v420
    %v505 = vpack.c.b16 %v423, %v422
    %v506 = vpack.c.b16 %v425, %v424
    %v507 = vpack.c.b16 %v427, %v426
    %v508 = vpack.c.b16 %v429, %v428
    %v509 = vpack.c.b16 %v431, %v430
    %v510 = vpack.c.b16 %v433, %v432
    %v511 = vpack.c.b16 %v435, %v434
    %v512 = vpack.c.b16 %v437, %v436
    %v513 = vpack.c.b16 %v439, %v438
    %v514 = vpack.c.b16 %v441, %v440
    %v515 = vpack.c.b16 %v443, %v442
    %v516 = vpack.c.b16 %v445, %v444
    %v517 = vpack.c.b16 %v447, %v446
    %v518 = vpack.c.b16 %v449, %v448
    %v519 = vpack.c.b16 %v451, %v450
    %v520 = vpack.c.b16 %v453, %v452
    %v521 = vpack.c.b16 %v455, %v454
    %v522 = vpack.c.b16 %v457, %v456
    %v523 = vpack.c.b16 %v459, %v458
    %588 = vmatprep.subr.bf16.mxu0 0
    %589 = vmatpush1.bf16.msra.mxu0 %v467
    %590 = vmatprep.subr.bf16.mxu0 0
    %591 = vmatpush1.bf16.msra.mxu0 %v466
    %592 = vmatprep.subr.bf16.mxu0 0
    %593 = vmatpush1.bf16.msra.mxu0 %v465
    %594 = vmatprep.subr.bf16.mxu0 0
    %595 = vmatpush1.bf16.msra.mxu0 %v464
    %596 = vmatprep.subr.bf16.mxu0 0
    %597 = vmatpush1.bf16.msra.mxu0 %v463
    %598 = vmatprep.subr.bf16.mxu0 0
    %599 = vmatpush1.bf16.msra.mxu0 %v462
    %600 = vmatprep.subr.bf16.mxu0 0
    %601 = vmatpush1.bf16.msra.mxu0 %v461
    %602 = vmatprep.subr.bf16.mxu0 0
    %603 = vmatpush1.bf16.msra.mxu0 %v460
    %604 = vmatprep.subr.bf16.mxu0 0
    %605 = vmatpush2.bf16.msra.mxu0 %v475
    %606 = vmatprep.subr.bf16.mxu0 0
    %607 = vmatpush2.bf16.msra.mxu0 %v474
    %608 = vmatprep.subr.bf16.mxu0 0
    %609 = vmatpush2.bf16.msra.mxu0 %v473
    %610 = vmatprep.subr.bf16.mxu0 0
    %611 = vmatpush2.bf16.msra.mxu0 %v472
    %612 = vmatprep.subr.bf16.mxu0 0
    %613 = vmatpush2.bf16.msra.mxu0 %v471
    %614 = vmatprep.subr.bf16.mxu0 0
    %615 = vmatpush2.bf16.msra.mxu0 %v470
    %616 = vmatprep.subr.bf16.mxu0 0
    %617 = vmatpush2.bf16.msra.mxu0 %v469
    %618 = vmatprep.subr.bf16.mxu0 0
    %619 = vmatpush2.bf16.msra.mxu0 %v468
    %620 = vmatprep.mubr.bf16.mxu0 %v189
    %621 = vmatmul.mubr.bf16.gmra.mxu0 %v188
    %v622 = vpop.f32.mrf.mxu0
    %v623 = vadd.f32 %v174, %v622
    %v624 = vpop.f32.mrf.mxu0
    %v625 = vpop.f32.mrf.mxu0
    %v626 = vpop.f32.mrf.mxu0
    %627 = vdwg.mxu0
    %628 = vmatprep.subr.bf16.mxu0 0
    %629 = vmatpush1.bf16.msra.mxu0 %v483
    %630 = vmatprep.subr.bf16.mxu0 0
    %631 = vmatpush1.bf16.msra.mxu0 %v482
    %632 = vmatprep.subr.bf16.mxu0 0
    %633 = vmatpush1.bf16.msra.mxu0 %v481
    %634 = vmatprep.subr.bf16.mxu0 0
    %635 = vmatpush1.bf16.msra.mxu0 %v480
    %636 = vmatprep.subr.bf16.mxu0 0
    %637 = vmatpush1.bf16.msra.mxu0 %v479
    %638 = vmatprep.subr.bf16.mxu0 0
    %639 = vmatpush1.bf16.msra.mxu0 %v478
    %640 = vmatprep.subr.bf16.mxu0 0
    %641 = vmatpush1.bf16.msra.mxu0 %v477
    %642 = vmatprep.subr.bf16.mxu0 0
    %643 = vmatpush1.bf16.msra.mxu0 %v476
    %644 = vmatprep.subr.bf16.mxu0 0
    %645 = vmatpush2.bf16.msra.mxu0 %v491
    %646 = vmatprep.subr.bf16.mxu0 0
    %647 = vmatpush2.bf16.msra.mxu0 %v490
    %648 = vmatprep.subr.bf16.mxu0 0
    %649 = vmatpush2.bf16.msra.mxu0 %v489
    %650 = vmatprep.subr.bf16.mxu0 0
    %651 = vmatpush2.bf16.msra.mxu0 %v488
    %652 = vmatprep.subr.bf16.mxu0 0
    %653 = vmatpush2.bf16.msra.mxu0 %v487
    %654 = vmatprep.subr.bf16.mxu0 0
    %655 = vmatpush2.bf16.msra.mxu0 %v486
    %656 = vmatprep.subr.bf16.mxu0 0
    %657 = vmatpush2.bf16.msra.mxu0 %v485
    %658 = vmatprep.subr.bf16.mxu0 0
    %659 = vmatpush2.bf16.msra.mxu0 %v484
    %660 = vmatprep.mubr.bf16.mxu0 %v191
    %661 = vmatmul.mubr.bf16.gmra.mxu0 %v190
    %v662 = vpop.f32.mrf.mxu0
    %v663 = vadd.f32 %v623, %v662
    %v664 = vpop.f32.mrf.mxu0
    %v665 = vpop.f32.mrf.mxu0
    %v666 = vpop.f32.mrf.mxu0
    %667 = vdwg.mxu0
    %668 = vmatprep.subr.bf16.mxu0 0
    %669 = vmatpush1.bf16.msra.mxu0 %v499
    %670 = vmatprep.subr.bf16.mxu0 0
    %671 = vmatpush1.bf16.msra.mxu0 %v498
    %672 = vmatprep.subr.bf16.mxu0 0
    %673 = vmatpush1.bf16.msra.mxu0 %v497
    %674 = vmatprep.subr.bf16.mxu0 0
    %675 = vmatpush1.bf16.msra.mxu0 %v496
    %676 = vmatprep.subr.bf16.mxu0 0
    %677 = vmatpush1.bf16.msra.mxu0 %v495
    %678 = vmatprep.subr.bf16.mxu0 0
    %679 = vmatpush1.bf16.msra.mxu0 %v494
    %680 = vmatprep.subr.bf16.mxu0 0
    %681 = vmatpush1.bf16.msra.mxu0 %v493
    %682 = vmatprep.subr.bf16.mxu0 0
    %683 = vmatpush1.bf16.msra.mxu0 %v492
    %684 = vmatprep.subr.bf16.mxu0 0
    %685 = vmatpush2.bf16.msra.mxu0 %v507
    %686 = vmatprep.subr.bf16.mxu0 0
    %687 = vmatpush2.bf16.msra.mxu0 %v506
    %688 = vmatprep.subr.bf16.mxu0 0
    %689 = vmatpush2.bf16.msra.mxu0 %v505
    %690 = vmatprep.subr.bf16.mxu0 0
    %691 = vmatpush2.bf16.msra.mxu0 %v504
    %692 = vmatprep.subr.bf16.mxu0 0
    %693 = vmatpush2.bf16.msra.mxu0 %v503
    %694 = vmatprep.subr.bf16.mxu0 0
    %695 = vmatpush2.bf16.msra.mxu0 %v502
    %696 = vmatprep.subr.bf16.mxu0 0
    %697 = vmatpush2.bf16.msra.mxu0 %v501
    %698 = vmatprep.subr.bf16.mxu0 0
    %699 = vmatpush2.bf16.msra.mxu0 %v500
    %700 = vmatprep.mubr.bf16.mxu0 %v193
    %701 = vmatmul.mubr.bf16.gmra.mxu0 %v192
    %v702 = vpop.f32.mrf.mxu0
    %v703 = vadd.f32 %v663, %v702
    %v704 = vpop.f32.mrf.mxu0
    %v705 = vpop.f32.mrf.mxu0
    %v706 = vpop.f32.mrf.mxu0
    %707 = vdwg.mxu0
    %708 = vmatprep.subr.bf16.mxu0 0
    %709 = vmatpush1.bf16.msra.mxu0 %v515
    %710 = vmatprep.subr.bf16.mxu0 0
    %711 = vmatpush1.bf16.msra.mxu0 %v514
    %712 = vmatprep.subr.bf16.mxu0 0
    %713 = vmatpush1.bf16.msra.mxu0 %v513
    %714 = vmatprep.subr.bf16.mxu0 0
    %715 = vmatpush1.bf16.msra.mxu0 %v512
    %716 = vmatprep.subr.bf16.mxu0 0
    %717 = vmatpush1.bf16.msra.mxu0 %v511
    %718 = vmatprep.subr.bf16.mxu0 0
    %719 = vmatpush1.bf16.msra.mxu0 %v510
    %720 = vmatprep.subr.bf16.mxu0 0
    %721 = vmatpush1.bf16.msra.mxu0 %v509
    %722 = vmatprep.subr.bf16.mxu0 0
    %723 = vmatpush1.bf16.msra.mxu0 %v508
    %724 = vmatprep.subr.bf16.mxu0 0
    %725 = vmatpush2.bf16.msra.mxu0 %v523
    %726 = vmatprep.subr.bf16.mxu0 0
    %727 = vmatpush2.bf16.msra.mxu0 %v522
    %728 = vmatprep.subr.bf16.mxu0 0
    %729 = vmatpush2.bf16.msra.mxu0 %v521
    %730 = vmatprep.subr.bf16.mxu0 0
    %731 = vmatpush2.bf16.msra.mxu0 %v520
    %732 = vmatprep.subr.bf16.mxu0 0
    %733 = vmatpush2.bf16.msra.mxu0 %v519
    %734 = vmatprep.subr.bf16.mxu0 0
    %735 = vmatpush2.bf16.msra.mxu0 %v518
    %736 = vmatprep.subr.bf16.mxu0 0
    %737 = vmatpush2.bf16.msra.mxu0 %v517
    %738 = vmatprep.subr.bf16.mxu0 0
    %739 = vmatpush2.bf16.msra.mxu0 %v516
    %740 = vmatprep.mubr.bf16.mxu0 %v195
    %741 = vmatmul.mubr.bf16.gmra.mxu0 %v194
    %v742 = vpop.f32.mrf.mxu0
    %v743 = vadd.f32 %v703, %v742
    %v744 = vpop.f32.mrf.mxu0
    %v745 = vpop.f32.mrf.mxu0
    %v746 = vpop.f32.mrf.mxu0
    %747 = vdwg.mxu0
    %v748 = vstv %s36
    %v749 = vmul.f32 %v743, %v748
    %750 = vst [vmem:[%s4] sm:$0xff] %v749
    // Predicated region
    $region22: #{model_with_temperature_forward.1} parent=1 // pred_check
      _
    $region23: #{model_with_temperature_forward.1} parent=1 // pred_check_branch
      %752 = sbr.rel (0) target = $region25
    $region24: #{model_with_temperature_forward.1} parent=1 // pred_region
      _
    $region25: #{model_with_temperature_forward.1} parent=1 // pred_fallthru
      _
    // Predicated region
    $region26: #{model_with_temperature_forward.1} parent=1 // pred_check
      _
    $region27: #{model_with_temperature_forward.1} parent=1 // pred_check_branch
      %754 = sbr.rel (0) target = $region29
    $region28: #{model_with_temperature_forward.1} parent=1 // pred_region
      _
    $region29: #{model_with_temperature_forward.1} parent=1 // pred_fallthru
      _
    %755 = vsyncpa [#allocation4], 1

</llo_original>
